<compile_context>
chip_gen: v7x
topology: tpu7x:2x2x1
jax: 0.10.0
libtpu: 0.0.40
codegen_flags: <defaults>
</compile_context>

<pallas_src>
import math

import jax
import jax.numpy as jnp
from jax import lax
from jax.experimental import pallas as pl
from jax.experimental.pallas import tpu as pltpu

EPS = 1e-6
NEG_INF = -1000000000.0


def mha_kernel(enc_ref, mask_ref, wqkv_ref, wo_ref, gamma_ref, beta_ref,
               out_ref, attn_ref):
    # enc_ref: (Bt, S, H); mask_ref: (Bt, 1, S, S)
    Bt, S, H = enc_ref.shape

    x = enc_ref[...]                                   # (Bt, S, H) f32
    x2 = x.reshape(Bt * S, H)                          # layout-preserving flatten

    # Fused QKV projection: one MXU matmul with N = 3H columns.
    # (1/sqrt(H) scale is already folded into the Q columns of wqkv.)
    qkv = jnp.dot(x2, wqkv_ref[...],
                  preferred_element_type=jnp.float32)  # (Bt*S, 3H)
    qkv = qkv.reshape(Bt, S, 3 * H)
    q = qkv[:, :, 0 * H:1 * H]                         # (Bt, S, H)  (pre-scaled)
    k = qkv[:, :, 1 * H:2 * H]
    v = qkv[:, :, 2 * H:3 * H]

    # Scores: contract last dims directly (no materialized k transpose).
    scores = lax.dot_general(
        q, k,
        dimension_numbers=(((2,), (2,)), ((0,), (0,))),
        preferred_element_type=jnp.float32)            # (Bt, S, S)

    mask = mask_ref[...][:, 0]                         # (Bt, S, S)
    scores = jnp.where(mask == 0, jnp.float32(NEG_INF), scores)

    # Numerically stable softmax; divide -> EUP reciprocal (frees VALU slot).
    m = jnp.max(scores, axis=-1, keepdims=True)
    e = jnp.exp(scores - m)
    denom = jnp.sum(e, axis=-1, keepdims=True)
    attn = e * pl.reciprocal(denom, approx=True)       # (Bt, S, S)
    attn_ref[...] = attn.reshape(Bt, 1, S, S)          # free: trailing dims unchanged

    # Context (batched attn @ v), output projection, residual.
    ctx = lax.dot_general(
        attn, v,
        dimension_numbers=(((2,), (1,)), ((0,), (0,))),
        preferred_element_type=jnp.float32)            # (Bt, S, H)
    proj = jnp.dot(ctx.reshape(Bt * S, H), wo_ref[...],
                   preferred_element_type=jnp.float32).reshape(Bt, S, H)
    y = proj + x                                       # dropout == identity (eval)

    # LayerNorm over last dim (biased variance), eps = 1e-6; rsqrt -> EUP.
    mean = jnp.mean(y, axis=-1, keepdims=True)
    var = jnp.mean((y - mean) ** 2, axis=-1, keepdims=True)
    normed = (y - mean) * lax.rsqrt(var + EPS)
    out_ref[...] = normed * gamma_ref[...] + beta_ref[...]   # (1,H) broadcasts


def prepare_params(w_q, w_k, w_v, w_o, gamma, beta):
    """One-time parameter preparation (hoisted out of the per-call path):
      * pre-transpose the PyTorch (out,in) Linear weights,
      * fold the 1/sqrt(H) attention scale into the Q weight columns,
      * fuse Q|K|V into one (H, 3H) matrix so the kernel does a single
        x @ W_qkv matmul."""
    H = w_q.shape[0]
    scale = 1.0 / math.sqrt(H)
    wqkv = jnp.concatenate(
        [jnp.transpose(w_q) * jnp.float32(scale),      # scale folded into Q
         jnp.transpose(w_k),
         jnp.transpose(w_v)], axis=1)                  # (H, 3H)
    wo_t = jnp.transpose(w_o)                          # (H, H)
    return dict(wqkv=wqkv, wo_t=wo_t,
                gamma=gamma.reshape(1, H), beta=beta.reshape(1, H))


def multi_head_attention(enc, mask, params, *, block_b=None):
    """enc: (B,S,H) f32; mask: (B,1,S,S) (0 = masked); params from prepare_params.
    Returns (output (B,S,H), attn_dist (B,1,S,S))."""
    B, S, H = enc.shape
    if block_b is None:
        block_b = next(d for d in (16, 8, 4, 2, 1) if B % d == 0)
        block_b = min(block_b, B)
    assert B % block_b == 0

    out, attn = pl.pallas_call(
        mha_kernel,
        out_shape=(
            jax.ShapeDtypeStruct((B, S, H), jnp.float32),
            jax.ShapeDtypeStruct((B, 1, S, S), jnp.float32),
        ),
        grid_spec=pltpu.PrefetchScalarGridSpec(
            num_scalar_prefetch=0,
            grid=(B // block_b,),
            in_specs=[
                pl.BlockSpec((block_b, S, H), lambda b: (b, 0, 0)),        # enc
                pl.BlockSpec((block_b, 1, S, S), lambda b: (b, 0, 0, 0)),  # mask
                pl.BlockSpec((H, 3 * H), lambda b: (0, 0)),                # W_qkv^T fused (Q pre-scaled)
                pl.BlockSpec((H, H), lambda b: (0, 0)),                    # W_O^T
                pl.BlockSpec((1, H), lambda b: (0, 0)),                    # gamma
                pl.BlockSpec((1, H), lambda b: (0, 0)),                    # beta
            ],
            out_specs=[
                pl.BlockSpec((block_b, S, H), lambda b: (b, 0, 0)),        # output
                pl.BlockSpec((block_b, 1, S, S), lambda b: (b, 0, 0, 0)),  # attn_dist
            ],
        ),
        compiler_params=pltpu.CompilerParams(
            dimension_semantics=("parallel",),
            vmem_limit_bytes=32 * 1024 * 1024,
        ),
    )(enc, mask.astype(jnp.float32),
      params["wqkv"], params["wo_t"], params["gamma"], params["beta"])
    return out, attn


def reference(enc, mask, w_q, w_k, w_v, w_o, gamma, beta):
    """Plain-JAX reference mirroring the PyTorch forward (num_heads=1, eval)."""
    B, S, H = enc.shape
    q = enc @ w_q.T
    k = enc @ w_k.T
    v = enc @ w_v.T
    q = q.reshape(B, S, 1, H).transpose(0, 2, 1, 3)
    k = k.reshape(B, S, 1, H).transpose(0, 2, 1, 3)
    v = v.reshape(B, S, 1, H).transpose(0, 2, 1, 3)
    scores = jnp.einsum("bhqd,bhkd->bhqk", q, k) / math.sqrt(H)
    scores = jnp.where(mask == 0, NEG_INF, scores)
    attn = jax.nn.softmax(scores, axis=-1)
    out = jnp.einsum("bhqk,bhkd->bhqd", attn, v)
    out = out.transpose(0, 2, 1, 3).reshape(B, S, H)
    y = out @ w_o.T + enc
    mean = jnp.mean(y, axis=-1, keepdims=True)
    var = jnp.mean((y - mean) ** 2, axis=-1, keepdims=True)
    y = (y - mean) / jnp.sqrt(var + EPS) * gamma + beta
    return y, attn


if __name__ == "__main__":
    B, S, H = 2, 8, 32
    num_heads = 1  # required by the PyTorch module's .view() (see note above)

    key = jax.random.PRNGKey(0)
    k_enc, k_q, k_k, k_v, k_o, k_m = jax.random.split(key, 6)

    enc = jax.random.normal(k_enc, (B, S, H), dtype=jnp.float32)
    # PyTorch Linear convention (out, in), no bias.
    w_q = jax.random.normal(k_q, (H, H), dtype=jnp.float32) * 0.05
    w_k = jax.random.normal(k_k, (H, H), dtype=jnp.float32) * 0.05
    w_v = jax.random.normal(k_v, (H, H), dtype=jnp.float32) * 0.05
    w_o = jax.random.normal(k_o, (H, H), dtype=jnp.float32) * 0.05
    gamma = jnp.ones((H,), dtype=jnp.float32)   # LayerNorm default init
    beta = jnp.zeros((H,), dtype=jnp.float32)

    # Causal-style mask, broadcast over heads: (B, 1, S, S), 1 = keep, 0 = masked.
    causal = jnp.tril(jnp.ones((S, S), dtype=jnp.float32))
    mask = jnp.broadcast_to(causal, (B, 1, S, S)).astype(jnp.float32)

    params = prepare_params(w_q, w_k, w_v, w_o, gamma, beta)  # one-time prep

    out, attn = multi_head_attention(enc, mask, params)
    out = jax.block_until_ready(out)
    attn = jax.block_until_ready(attn)

    out_ref, attn_ref = reference(enc, mask, w_q, w_k, w_v, w_o, gamma, beta)
    # Tolerances slightly loosened vs. exact-divide because the softmax
    # normalization uses the EUP approximate reciprocal.
    assert jnp.allclose(attn, attn_ref, atol=2e-3, rtol=2e-3), "attn mismatch"
    assert jnp.allclose(out, out_ref, atol=3e-3, rtol=3e-3), "output mismatch"

    print("KERNEL_OK")
</pallas_src>

<mosaic_0001>
module attributes {stable_mosaic.version = 11 : i64} {
  func.func @mha_kernel(%arg0: i32, %arg1: memref<2x8x32xf32, #tpu.memory_space<vmem>>, %arg2: memref<2x1x8x8xf32, #tpu.memory_space<vmem>>, %arg3: memref<32x96xf32, #tpu.memory_space<vmem>>, %arg4: memref<32x32xf32, #tpu.memory_space<vmem>>, %arg5: memref<1x32xf32, #tpu.memory_space<vmem>>, %arg6: memref<1x32xf32, #tpu.memory_space<vmem>>, %arg7: memref<2x8x32xf32, #tpu.memory_space<vmem>>, %arg8: memref<2x1x8x8xf32, #tpu.memory_space<vmem>>) attributes {dimension_semantics = [#tpu.dimension_semantics<parallel>], iteration_bounds = array<i64: 1>, scalar_prefetch = 0 : i64, scratch_operands = 0 : i64, tpu.core_type = #tpu.core_type<tc>, window_params = [{transform_indices = @transform_0, window_bounds = array<i64: 2, 8, 32>}, {transform_indices = @transform_1, window_bounds = array<i64: 2, 1, 8, 8>}, {pipeline_mode = #tpu.pipeline_mode<synchronous>, transform_indices = @transform_2, window_bounds = array<i64: 32, 96>}, {pipeline_mode = #tpu.pipeline_mode<synchronous>, transform_indices = @transform_3, window_bounds = array<i64: 32, 32>}, {pipeline_mode = #tpu.pipeline_mode<synchronous>, transform_indices = @transform_4, window_bounds = array<i64: 1, 32>}, {pipeline_mode = #tpu.pipeline_mode<synchronous>, transform_indices = @transform_5, window_bounds = array<i64: 1, 32>}, {transform_indices = @transform_6, window_bounds = array<i64: 2, 8, 32>}, {transform_indices = @transform_7, window_bounds = array<i64: 2, 1, 8, 8>}]} {
    %c0 = arith.constant 0 : index
    %c0_0 = arith.constant 0 : index
    %c0_1 = arith.constant 0 : index
    %0 = vector.load %arg1[%c0, %c0_0, %c0_1] : memref<2x8x32xf32, #tpu.memory_space<vmem>>, vector<2x8x32xf32>
    %1 = vector.shape_cast %0 : vector<2x8x32xf32> to vector<16x32xf32>
    %c0_2 = arith.constant 0 : index
    %c0_3 = arith.constant 0 : index
    %2 = vector.load %arg3[%c0_2, %c0_3] : memref<32x96xf32, #tpu.memory_space<vmem>>, vector<32x96xf32>
    %cst = arith.constant dense<0.000000e+00> : vector<16x96xf32>
    %3 = tpu.matmul %1, %2, %cst {dimension_numbers = #tpu.dot_dimension_numbers<[1], [0], [0], [1], [0, 0, 1, 1], [], []>} : vector<16x32xf32>, vector<32x96xf32>, vector<16x96xf32> -> vector<16x96xf32>
    %4 = vector.shape_cast %3 : vector<16x96xf32> to vector<2x8x96xf32>
    %5 = vector.extract_strided_slice %4 {offsets = [0, 0, 0], sizes = [2, 8, 32], strides = [1, 1, 1]} : vector<2x8x96xf32> to vector<2x8x32xf32>
    %6 = vector.extract_strided_slice %4 {offsets = [0, 0, 32], sizes = [2, 8, 32], strides = [1, 1, 1]} : vector<2x8x96xf32> to vector<2x8x32xf32>
    %7 = vector.extract_strided_slice %4 {offsets = [0, 0, 64], sizes = [2, 8, 32], strides = [1, 1, 1]} : vector<2x8x96xf32> to vector<2x8x32xf32>
    %cst_4 = arith.constant dense<0.000000e+00> : vector<2x8x8xf32>
    %8 = tpu.matmul %5, %6, %cst_4 {dimension_numbers = #tpu.dot_dimension_numbers<[2], [2], [1], [1], [0, 0, 0, 1, 1, 1], [0], [0]>} : vector<2x8x32xf32>, vector<2x8x32xf32>, vector<2x8x8xf32> -> vector<2x8x8xf32>
    %c0_5 = arith.constant 0 : index
    %c0_6 = arith.constant 0 : index
    %c0_7 = arith.constant 0 : index
    %c0_8 = arith.constant 0 : index
    %9 = vector.load %arg2[%c0_5, %c0_6, %c0_7, %c0_8] : memref<2x1x8x8xf32, #tpu.memory_space<vmem>>, vector<2x1x8x8xf32>
    %10 = vector.shape_cast %9 : vector<2x1x8x8xf32> to vector<2x8x8xf32>
    %cst_9 = arith.constant 0.000000e+00 : f32
    %11 = vector.broadcast %cst_9 : f32 to vector<2x8x8xf32>
    %12 = arith.cmpf oeq, %10, %11 : vector<2x8x8xf32>
    %cst_10 = arith.constant -1.000000e+09 : f32
    %13 = vector.broadcast %cst_10 : f32 to vector<2x8x8xf32>
    %14 = arith.select %12, %13, %8 : vector<2x8x8xi1>, vector<2x8x8xf32>
    %cst_11 = arith.constant dense<0xFF800000> : vector<2x8xf32>
    %15 = vector.multi_reduction <maximumf>, %14, %cst_11 [2] : vector<2x8x8xf32> to vector<2x8xf32>
    %16 = vector.shape_cast %15 : vector<2x8xf32> to vector<2x8x1xf32>
    %17 = vector.broadcast %16 : vector<2x8x1xf32> to vector<2x8x8xf32>
    %18 = arith.subf %14, %17 : vector<2x8x8xf32>
    %19 = math.exp %18 : vector<2x8x8xf32>
    %cst_12 = arith.constant dense<0.000000e+00> : vector<2x8xf32>
    %20 = vector.multi_reduction <add>, %19, %cst_12 [2] : vector<2x8x8xf32> to vector<2x8xf32>
    %21 = vector.shape_cast %20 : vector<2x8xf32> to vector<2x8x1xf32>
    %22 = tpu.reciprocal %21 {approx = true} : vector<2x8x1xf32> -> vector<2x8x1xf32>
    %23 = vector.broadcast %22 : vector<2x8x1xf32> to vector<2x8x8xf32>
    %24 = arith.mulf %19, %23 : vector<2x8x8xf32>
    %25 = vector.shape_cast %24 : vector<2x8x8xf32> to vector<2x1x8x8xf32>
    %c0_13 = arith.constant 0 : index
    %c0_14 = arith.constant 0 : index
    %c0_15 = arith.constant 0 : index
    %c0_16 = arith.constant 0 : index
    %26 = vector.load %arg8[%c0_13, %c0_14, %c0_15, %c0_16] : memref<2x1x8x8xf32, #tpu.memory_space<vmem>>, vector<2x1x8x8xf32>
    tpu.vector_store %arg8[%c0_13, %c0_14, %c0_15, %c0_16], %25 {strides = array<i32>} : memref<2x1x8x8xf32, #tpu.memory_space<vmem>>, vector<2x1x8x8xf32>,
    %cst_17 = arith.constant dense<0.000000e+00> : vector<2x8x32xf32>
    %27 = tpu.matmul %24, %7, %cst_17 {dimension_numbers = #tpu.dot_dimension_numbers<[2], [1], [1], [2], [0, 0, 0, 1, 1, 2], [0], [0]>} : vector<2x8x8xf32>, vector<2x8x32xf32>, vector<2x8x32xf32> -> vector<2x8x32xf32>
    %28 = vector.shape_cast %27 : vector<2x8x32xf32> to vector<16x32xf32>
    %c0_18 = arith.constant 0 : index
    %c0_19 = arith.constant 0 : index
    %29 = vector.load %arg4[%c0_18, %c0_19] : memref<32x32xf32, #tpu.memory_space<vmem>>, vector<32x32xf32>
    %cst_20 = arith.constant dense<0.000000e+00> : vector<16x32xf32>
    %30 = tpu.matmul %28, %29, %cst_20 {dimension_numbers = #tpu.dot_dimension_numbers<[1], [0], [0], [1], [0, 0, 1, 1], [], []>} : vector<16x32xf32>, vector<32x32xf32>, vector<16x32xf32> -> vector<16x32xf32>
    %31 = vector.shape_cast %30 : vector<16x32xf32> to vector<2x8x32xf32>
    %32 = arith.addf %31, %0 : vector<2x8x32xf32>
    %cst_21 = arith.constant dense<0.000000e+00> : vector<2x8xf32>
    %33 = vector.multi_reduction <add>, %32, %cst_21 [2] : vector<2x8x32xf32> to vector<2x8xf32>
    %34 = vector.shape_cast %33 : vector<2x8xf32> to vector<2x8x1xf32>
    %cst_22 = arith.constant 3.200000e+01 : f32
    %35 = vector.broadcast %cst_22 : f32 to vector<2x8x1xf32>
    %36 = arith.divf %34, %35 : vector<2x8x1xf32>
    %37 = vector.broadcast %36 : vector<2x8x1xf32> to vector<2x8x32xf32>
    %38 = arith.subf %32, %37 : vector<2x8x32xf32>
    %39 = arith.mulf %38, %38 : vector<2x8x32xf32>
    %cst_23 = arith.constant dense<0.000000e+00> : vector<2x8xf32>
    %40 = vector.multi_reduction <add>, %39, %cst_23 [2] : vector<2x8x32xf32> to vector<2x8xf32>
    %41 = vector.shape_cast %40 : vector<2x8xf32> to vector<2x8x1xf32>
    %cst_24 = arith.constant 3.200000e+01 : f32
    %42 = vector.broadcast %cst_24 : f32 to vector<2x8x1xf32>
    %43 = arith.divf %41, %42 : vector<2x8x1xf32>
    %44 = vector.broadcast %36 : vector<2x8x1xf32> to vector<2x8x32xf32>
    %45 = arith.subf %32, %44 : vector<2x8x32xf32>
    %cst_25 = arith.constant 9.99999997E-7 : f32
    %46 = vector.broadcast %cst_25 : f32 to vector<2x8x1xf32>
    %47 = arith.addf %43, %46 : vector<2x8x1xf32>
    %48 = math.rsqrt %47 : vector<2x8x1xf32>
    %49 = vector.broadcast %48 : vector<2x8x1xf32> to vector<2x8x32xf32>
    %50 = arith.mulf %45, %49 : vector<2x8x32xf32>
    %c0_26 = arith.constant 0 : index
    %c0_27 = arith.constant 0 : index
    %51 = vector.load %arg5[%c0_26, %c0_27] : memref<1x32xf32, #tpu.memory_space<vmem>>, vector<1x32xf32>
    %52 = vector.shape_cast %51 : vector<1x32xf32> to vector<1x1x32xf32>
    %53 = vector.broadcast %52 : vector<1x1x32xf32> to vector<2x8x32xf32>
    %54 = arith.mulf %50, %53 : vector<2x8x32xf32>
    %c0_28 = arith.constant 0 : index
    %c0_29 = arith.constant 0 : index
    %55 = vector.load %arg6[%c0_28, %c0_29] : memref<1x32xf32, #tpu.memory_space<vmem>>, vector<1x32xf32>
    %56 = vector.shape_cast %55 : vector<1x32xf32> to vector<1x1x32xf32>
    %57 = vector.broadcast %56 : vector<1x1x32xf32> to vector<2x8x32xf32>
    %58 = arith.addf %54, %57 : vector<2x8x32xf32>
    %c0_30 = arith.constant 0 : index
    %c0_31 = arith.constant 0 : index
    %c0_32 = arith.constant 0 : index
    %59 = vector.load %arg7[%c0_30, %c0_31, %c0_32] : memref<2x8x32xf32, #tpu.memory_space<vmem>>, vector<2x8x32xf32>
    tpu.vector_store %arg7[%c0_30, %c0_31, %c0_32], %58 {strides = array<i32>} : memref<2x8x32xf32, #tpu.memory_space<vmem>>, vector<2x8x32xf32>,
    return
  }
  func.func @transform_0(%arg0: i32) -> (i32, i32, i32) {
    %c0_i32 = arith.constant 0 : i32
    %c0_i32_0 = arith.constant 0 : i32
    %c0_i32_1 = arith.constant 0 : i32
    return %arg0, %c0_i32, %c0_i32_0 : i32, i32, i32
  }
  func.func @transform_1(%arg0: i32) -> (i32, i32, i32, i32) {
    %c0_i32 = arith.constant 0 : i32
    %c0_i32_0 = arith.constant 0 : i32
    %c0_i32_1 = arith.constant 0 : i32
    %c0_i32_2 = arith.constant 0 : i32
    return %arg0, %c0_i32, %c0_i32_0, %c0_i32_1 : i32, i32, i32, i32
  }
  func.func @transform_2(%arg0: i32) -> (i32, i32) {
    %c0_i32 = arith.constant 0 : i32
    %c0_i32_0 = arith.constant 0 : i32
    %c0_i32_1 = arith.constant 0 : i32
    return %c0_i32, %c0_i32_0 : i32, i32
  }
  func.func @transform_3(%arg0: i32) -> (i32, i32) {
    %c0_i32 = arith.constant 0 : i32
    %c0_i32_0 = arith.constant 0 : i32
    %c0_i32_1 = arith.constant 0 : i32
    return %c0_i32, %c0_i32_0 : i32, i32
  }
  func.func @transform_4(%arg0: i32) -> (i32, i32) {
    %c0_i32 = arith.constant 0 : i32
    %c0_i32_0 = arith.constant 0 : i32
    %c0_i32_1 = arith.constant 0 : i32
    return %c0_i32, %c0_i32_0 : i32, i32
  }
  func.func @transform_5(%arg0: i32) -> (i32, i32) {
    %c0_i32 = arith.constant 0 : i32
    %c0_i32_0 = arith.constant 0 : i32
    %c0_i32_1 = arith.constant 0 : i32
    return %c0_i32, %c0_i32_0 : i32, i32
  }
  func.func @transform_6(%arg0: i32) -> (i32, i32, i32) {
    %c0_i32 = arith.constant 0 : i32
    %c0_i32_0 = arith.constant 0 : i32
    %c0_i32_1 = arith.constant 0 : i32
    return %arg0, %c0_i32, %c0_i32_0 : i32, i32, i32
  }
  func.func @transform_7(%arg0: i32) -> (i32, i32, i32, i32) {
    %c0_i32 = arith.constant 0 : i32
    %c0_i32_0 = arith.constant 0 : i32
    %c0_i32_1 = arith.constant 0 : i32
    %c0_i32_2 = arith.constant 0 : i32
    return %arg0, %c0_i32, %c0_i32_0, %c0_i32_1 : i32, i32, i32, i32
  }
}

</mosaic_0001>

<llo_original>
// kernel: tpu_custom_call.1
$region0: #{tpu_custom_call.1}
  #allocation0 [shape = 'u32[]', space=smem, size = 0x4, offset = 0x4, fixed_abs, tag = 'smem constant byte address 0x4 - core index']
  #allocation1 [shape = 'u32[144,128]{1,0:T(1,128)}', space=vmem, size = 0x12000, scoped, tag = 'internal scratch']
  %s0 = inlined_call_operand.hbm [shape: f32[2,8,32], index: 0, kind: input, shape index: {}]
  %s1 = inlined_call_operand.hbm [shape: f32[2,1,8,8], index: 1, kind: input, shape index: {}]
  %s2 = inlined_call_operand.hbm [shape: f32[32,96], index: 2, kind: input, shape index: {}]
  %s3 = inlined_call_operand.hbm [shape: f32[32,32], index: 3, kind: input, shape index: {}]
  %s4 = inlined_call_operand.vmem [shape: f32[1,32], index: 4, kind: input, shape index: {}]
  %s5 = inlined_call_operand.vmem [shape: f32[1,32], index: 5, kind: input, shape index: {}]
  %s6 = inlined_call_operand.hbm [shape: f32[2,8,32], index: 6, kind: output, shape index: {0}]
  %s7 = inlined_call_operand.hbm [shape: f32[2,1,8,8], index: 7, kind: output, shape index: {1}]
  %8 = xla_tuple %s6, %s7
  %s9 = sld [smem:[#allocation0]]
  $region58: #{tpu_custom_call.1} parent=0
    _
  %s11 = ssub.s32 1, %s9
  %s12 = scalar_select 0, %s11, %s9
  $region1: #{tpu_custom_call.1} parent=0
    #allocation2 [shape = 'u8[8192]{0}', space=vmem, size = 0x2000, scoped, tag = 'input window, operand 0, single buffered']
    #allocation3 [shape = 's32[1]{0}', space=sflag, size = 0x4, scoped, tag = 'scoped memory for tpu_custom_call.1']
    #allocation4 [shape = 's32[1]{0}', space=sflag, size = 0x4, scoped, tag = 'scoped memory for tpu_custom_call.1']
    #allocation5 [shape = 'u8[8192]{0}', space=vmem, size = 0x2000, scoped, tag = 'input window, operand 1, single buffered']
    #allocation6 [shape = 's32[1]{0}', space=sflag, size = 0x4, scoped, tag = 'scoped memory for tpu_custom_call.1']
    #allocation7 [shape = 'u8[16384]{0}', space=vmem, size = 0x4000, scoped, tag = 'input window, operand 2, single buffered']
    #allocation8 [shape = 'u8[16384]{0}', space=vmem, size = 0x4000, scoped, tag = 'input window, operand 3, single buffered']
    #allocation9 [shape = 's32[1]{0}', space=sflag, size = 0x4, scoped, tag = 'scoped memory for tpu_custom_call.1']
    #allocation10 [shape = 'u8[8192]{0}', space=vmem, size = 0x2000, scoped, tag = 'output window, operand 0, single buffered']
    #allocation11 [shape = 'u8[8192]{0}', space=vmem, size = 0x2000, scoped, tag = 'output window, operand 1, single buffered']
    #allocation12 [shape = 's32[1]{0}', space=sflag, size = 0x4, scoped, tag = 'scoped memory for tpu_custom_call.1']
    %13 = vsyncpa [#allocation3], 0
    %14 = vsyncpa [#allocation6], 0
    %15 = vsyncpa [#allocation9], 0
    %16 = vsyncpa [#allocation4], 0
    %17 = vsyncpa [#allocation12], 0
    // Predicated region
    $region2: #{tpu_custom_call.1} parent=1 // pred_check
      _
    $region3: #{tpu_custom_call.1} parent=1 // pred_check_branch
      %19 = sbr.rel (0) target = $region5
    $region4: #{tpu_custom_call.1} parent=1 // pred_region
      %s21 = ssub.s32 256, 256
      %22 = vsyncadd [#allocation3], %s21
      %s23 = sshll.u32 [#allocation2], 4
      %s24 = int_to_ptr.vmem [resolvable:$true] %s23
      %29 = dma.hbm_to_vmem [thread:$0]  %s0, 256, %s24, [#allocation3], 128, 128, 8
    $region5: #{tpu_custom_call.1} parent=1 // pred_fallthru
      _
    // Predicated region
    $region6: #{tpu_custom_call.1} parent=1 // pred_check
      _
    $region7: #{tpu_custom_call.1} parent=1 // pred_check_branch
      %31 = sbr.rel (0) target = $region9
    $region8: #{tpu_custom_call.1} parent=1 // pred_region
      %s33 = ssub.s32 256, 256
      %34 = vsyncadd [#allocation6], %s33
      %s35 = sshll.u32 [#allocation5], 4
      %s36 = int_to_ptr.vmem [resolvable:$true] %s35
      %41 = dma.hbm_to_vmem [thread:$0]  %s1, 256, %s36, [#allocation6], 128, 128, 8
    $region9: #{tpu_custom_call.1} parent=1 // pred_fallthru
      _
    // Predicated region
    $region10: #{tpu_custom_call.1} parent=1 // pred_check
      _
    $region11: #{tpu_custom_call.1} parent=1 // pred_check_branch
      %43 = sbr.rel (0) target = $region13
    $region12: #{tpu_custom_call.1} parent=1 // pred_region
      %s45 = ssub.s32 512, 512
      %46 = vsyncadd [#allocation6], %s45
      %s47 = sshll.u32 [#allocation7], 4
      %s48 = int_to_ptr.vmem [resolvable:$true] %s47
      %53 = dma.hbm_to_vmem [thread:$0]  %s2, 512, %s48, [#allocation6], 128, 128, 8
    $region13: #{tpu_custom_call.1} parent=1 // pred_fallthru
      _
    // Predicated region
    $region14: #{tpu_custom_call.1} parent=1 // pred_check
      _
    $region15: #{tpu_custom_call.1} parent=1 // pred_check_branch
      %55 = sbr.rel (0) target = $region17
    $region16: #{tpu_custom_call.1} parent=1 // pred_region
      %s57 = ssub.s32 512, 512
      %58 = vsyncadd [#allocation9], %s57
      %s59 = sshll.u32 [#allocation8], 4
      %s60 = int_to_ptr.vmem [resolvable:$true] %s59
      %65 = dma.hbm_to_vmem [thread:$0]  %s3, 512, %s60, [#allocation9], 128, 128, 8
    $region17: #{tpu_custom_call.1} parent=1 // pred_fallthru
      _
    // Predicated region
    $region18: #{tpu_custom_call.1} parent=1 // pred_check
      _
    $region19: #{tpu_custom_call.1} parent=1 // pred_check_branch
      %67 = sbr.rel (0) target = $region21
    $region20: #{tpu_custom_call.1} parent=1 // pred_region
      _
    $region21: #{tpu_custom_call.1} parent=1 // pred_fallthru
      _
    // Predicated region
    $region22: #{tpu_custom_call.1} parent=1 // pred_check
      _
    $region23: #{tpu_custom_call.1} parent=1 // pred_check_branch
      %69 = sbr.rel (0) target = $region25
    $region24: #{tpu_custom_call.1} parent=1 // pred_region
      _
    $region25: #{tpu_custom_call.1} parent=1 // pred_fallthru
      _
    // Predicated region
    $region26: #{tpu_custom_call.1} parent=1 // pred_check
      _
    $region27: #{tpu_custom_call.1} parent=1 // pred_check_branch
      %71 = sbr.rel (0) target = $region29
    $region28: #{tpu_custom_call.1} parent=1 // pred_region
      %72 = dma.done [#allocation3], 256
    $region29: #{tpu_custom_call.1} parent=1 // pred_fallthru
      _
    // Predicated region
    $region30: #{tpu_custom_call.1} parent=1 // pred_check
      _
    $region31: #{tpu_custom_call.1} parent=1 // pred_check_branch
      %74 = sbr.rel (0) target = $region33
    $region32: #{tpu_custom_call.1} parent=1 // pred_region
      %75 = dma.done [#allocation6], 256
    $region33: #{tpu_custom_call.1} parent=1 // pred_fallthru
      _
    // Predicated region
    $region34: #{tpu_custom_call.1} parent=1 // pred_check
      _
    $region35: #{tpu_custom_call.1} parent=1 // pred_check_branch
      %77 = sbr.rel (0) target = $region37
    $region36: #{tpu_custom_call.1} parent=1 // pred_region
      %78 = dma.done [#allocation6], 512
    $region37: #{tpu_custom_call.1} parent=1 // pred_fallthru
      _
    // Predicated region
    $region38: #{tpu_custom_call.1} parent=1 // pred_check
      _
    $region39: #{tpu_custom_call.1} parent=1 // pred_check_branch
      %80 = sbr.rel (0) target = $region41
    $region40: #{tpu_custom_call.1} parent=1 // pred_region
      %81 = dma.done [#allocation9], 512
    $region41: #{tpu_custom_call.1} parent=1 // pred_fallthru
      _
    %v82 = vld [vmem:[#allocation2] sm:$0xff]
    %v83 = vld [vmem:[#allocation2 + $0x8] sm:$0xff]
    %v84 = vld [vmem:[#allocation7] sm:$0xff]
    %v85 = vld [vmem:[#allocation7 + $0x8] sm:$0xff]
    %v86 = vld [vmem:[#allocation7 + $0x10] sm:$0xff]
    %v87 = vld [vmem:[#allocation7 + $0x18] sm:$0xff]
    %vm88 = vcmask 261120
    %v90 = vsel %vm88, %v82, 0
    %v93 = vsel %vm88, %v83, 0
    %95 = vmatprep.subr.mxu0 0.0
    %96 = vmatpush1.msra.mxu0 %v84
    %97 = vmatprep.subr.mxu0 0.0
    %98 = vmatpush1.msra.mxu0 %v85
    %99 = vmatprep.subr.mxu0 0.0
    %100 = vmatpush1.msra.mxu0 %v86
    %101 = vmatprep.subr.mxu0 0.0
    %102 = vmatpush1.msra.mxu0 %v87
    %103 = vmatprep.subr.mxu0 0.0
    %104 = vmatpush1.msra.mxu0 0.0
    %105 = vmatprep.subr.mxu0 0.0
    %106 = vmatpush1.msra.mxu0 0.0
    %107 = vmatprep.subr.mxu0 0.0
    %108 = vmatpush1.msra.mxu0 0.0
    %109 = vmatprep.subr.mxu0 0.0
    %110 = vmatpush1.msra.mxu0 0.0
    %111 = vmatprep.subr.mxu0 0.0
    %112 = vmatpush1.msra.mxu0 0.0
    %113 = vmatprep.subr.mxu0 0.0
    %114 = vmatpush1.msra.mxu0 0.0
    %115 = vmatprep.subr.mxu0 0.0
    %116 = vmatpush1.msra.mxu0 0.0
    %117 = vmatprep.subr.mxu0 0.0
    %118 = vmatpush1.msra.mxu0 0.0
    %119 = vmatprep.subr.mxu0 0.0
    %120 = vmatpush1.msra.mxu0 0.0
    %121 = vmatprep.subr.mxu0 0.0
    %122 = vmatpush1.msra.mxu0 0.0
    %123 = vmatprep.subr.mxu0 0.0
    %124 = vmatpush1.msra.mxu0 0.0
    %125 = vmatprep.subr.mxu0 0.0
    %126 = vmatpush1.msra.mxu0 0.0
    %127 = vmatprep.subr.mxu0 0.0
    %128 = vmatpush1.msra.mxu0 0.0
    %129 = vmatprep.subr.mxu0 0.0
    %130 = vmatpush1.msra.mxu0 0.0
    %131 = vmatprep.subr.mxu0 0.0
    %132 = vmatpush1.msra.mxu0 0.0
    %133 = vmatprep.subr.mxu0 0.0
    %134 = vmatpush1.msra.mxu0 0.0
    %135 = vmatprep.subr.mxu0 0.0
    %136 = vmatpush1.msra.mxu0 0.0
    %137 = vmatprep.subr.mxu0 0.0
    %138 = vmatpush1.msra.mxu0 0.0
    %139 = vmatprep.subr.mxu0 0.0
    %140 = vmatpush1.msra.mxu0 0.0
    %141 = vmatprep.subr.mxu0 0.0
    %142 = vmatpush1.msra.mxu0 0.0
    %143 = vmatprep.subr.mxu0 0.0
    %144 = vmatpush1.msra.mxu0 0.0
    %145 = vmatprep.subr.mxu0 0.0
    %146 = vmatpush1.msra.mxu0 0.0
    %147 = vmatprep.subr.mxu0 0.0
    %148 = vmatpush1.msra.mxu0 0.0
    %149 = vmatprep.subr.mxu0 0.0
    %150 = vmatpush1.msra.mxu0 0.0
    %151 = vmatprep.subr.mxu0 0.0
    %152 = vmatpush1.msra.mxu0 0.0
    %153 = vmatprep.subr.mxu0 0.0
    %154 = vmatpush1.msra.mxu0 0.0
    %155 = vmatprep.subr.mxu0 0.0
    %156 = vmatpush1.msra.mxu0 0.0
    %157 = vmatprep.subr.mxu0 0.0
    %158 = vmatpush1.msra.mxu0 0.0
    %159 = vmatprep.mubr.f32.mxu0 0.0
    %160 = vmatmul.mubr.f32.gmra.mrb[0].mxu0 %v90
    %v161 = vpop.f32.mrb[0].mxu0
    %v162 = vadd.f32 0.0, %v161
    %v163 = vpop.f32.mrb[0].mxu0
    %164 = vmatprep.mubr.f32.mxu0 0.0
    %165 = vmatmul.mubr.f32.gmra.mrb[0].mxu0 %v93
    %v166 = vpop.f32.mrb[0].mxu0
    %v167 = vadd.f32 0.0, %v166
    %v168 = vpop.f32.mrb[0].mxu0
    %169 = vdwg.mxu0
    %171 = vrot.lane.b32.xlu0 %v162, 96
    %v172 = vpop.permute.xlu0 %171
    %v173 = vsel %vm88, %v162, 0
    %v175 = vsel %vm88, %v172, 0
    %177 = vmatprep.subr.mxu0 0.0
    %178 = vmatpush1.xpose.msra.mxu0 %v175
    %179 = vmatprep.subr.mxu0 0.0
    %180 = vmatpush1.xpose.msra.mxu0 0.0
    %181 = vmatprep.subr.mxu0 0.0
    %182 = vmatpush1.xpose.msra.mxu0 0.0
    %183 = vmatprep.subr.mxu0 0.0
    %184 = vmatpush1.xpose.msra.mxu0 0.0
    %185 = vmatprep.subr.mxu0 0.0
    %186 = vmatpush1.xpose.msra.mxu0 0.0
    %187 = vmatprep.subr.mxu0 0.0
    %188 = vmatpush1.xpose.msra.mxu0 0.0
    %189 = vmatprep.subr.mxu0 0.0
    %190 = vmatpush1.xpose.msra.mxu0 0.0
    %191 = vmatprep.subr.mxu0 0.0
    %192 = vmatpush1.xpose.msra.mxu0 0.0
    %193 = vmatprep.subr.mxu0 0.0
    %194 = vmatpush1.xpose.msra.mxu0 0.0
    %195 = vmatprep.subr.mxu0 0.0
    %196 = vmatpush1.xpose.msra.mxu0 0.0
    %197 = vmatprep.subr.mxu0 0.0
    %198 = vmatpush1.xpose.msra.mxu0 0.0
    %199 = vmatprep.subr.mxu0 0.0
    %200 = vmatpush1.xpose.msra.mxu0 0.0
    %201 = vmatprep.subr.mxu0 0.0
    %202 = vmatpush1.xpose.msra.mxu0 0.0
    %203 = vmatprep.subr.mxu0 0.0
    %204 = vmatpush1.xpose.msra.mxu0 0.0
    %205 = vmatprep.subr.mxu0 0.0
    %206 = vmatpush1.xpose.msra.mxu0 0.0
    %207 = vmatprep.subr.mxu0 0.0
    %208 = vmatpush1.xpose.msra.mxu0 0.0
    %209 = vmatprep.subr.mxu0 0.0
    %210 = vmatpush1.xpose.msra.mxu0 0.0
    %211 = vmatprep.subr.mxu0 0.0
    %212 = vmatpush1.xpose.msra.mxu0 0.0
    %213 = vmatprep.subr.mxu0 0.0
    %214 = vmatpush1.xpose.msra.mxu0 0.0
    %215 = vmatprep.subr.mxu0 0.0
    %216 = vmatpush1.xpose.msra.mxu0 0.0
    %217 = vmatprep.subr.mxu0 0.0
    %218 = vmatpush1.xpose.msra.mxu0 0.0
    %219 = vmatprep.subr.mxu0 0.0
    %220 = vmatpush1.xpose.msra.mxu0 0.0
    %221 = vmatprep.subr.mxu0 0.0
    %222 = vmatpush1.xpose.msra.mxu0 0.0
    %223 = vmatprep.subr.mxu0 0.0
    %224 = vmatpush1.xpose.msra.mxu0 0.0
    %225 = vmatprep.subr.mxu0 0.0
    %226 = vmatpush1.xpose.msra.mxu0 0.0
    %227 = vmatprep.subr.mxu0 0.0
    %228 = vmatpush1.xpose.msra.mxu0 0.0
    %229 = vmatprep.subr.mxu0 0.0
    %230 = vmatpush1.xpose.msra.mxu0 0.0
    %231 = vmatprep.subr.mxu0 0.0
    %232 = vmatpush1.xpose.msra.mxu0 0.0
    %233 = vmatprep.subr.mxu0 0.0
    %234 = vmatpush1.xpose.msra.mxu0 0.0
    %235 = vmatprep.subr.mxu0 0.0
    %236 = vmatpush1.xpose.msra.mxu0 0.0
    %237 = vmatprep.subr.mxu0 0.0
    %238 = vmatpush1.xpose.msra.mxu0 0.0
    %239 = vmatprep.subr.mxu0 0.0
    %240 = vmatpush1.xpose.msra.mxu0 0.0
    %241 = vmatprep.mubr.f32.mxu0 0.0
    %242 = vmatmul.mubr.f32.gmra.mrb[0].mxu0 %v173
    %v243 = vpop.f32.mrb[0].mxu0
    %v244 = vadd.f32 0.0, %v243
    %v245 = vpop.f32.mrb[0].mxu0
    %246 = vdwg.mxu0
    %248 = vrot.lane.b32.xlu0 %v167, 96
    %v249 = vpop.permute.xlu0 %248
    %v250 = vsel %vm88, %v167, 0
    %v252 = vsel %vm88, %v249, 0
    %254 = vmatprep.subr.mxu0 0.0
    %255 = vmatpush1.xpose.msra.mxu0 %v252
    %256 = vmatprep.subr.mxu0 0.0
    %257 = vmatpush1.xpose.msra.mxu0 0.0
    %258 = vmatprep.subr.mxu0 0.0
    %259 = vmatpush1.xpose.msra.mxu0 0.0
    %260 = vmatprep.subr.mxu0 0.0
    %261 = vmatpush1.xpose.msra.mxu0 0.0
    %262 = vmatprep.subr.mxu0 0.0
    %263 = vmatpush1.xpose.msra.mxu0 0.0
    %264 = vmatprep.subr.mxu0 0.0
    %265 = vmatpush1.xpose.msra.mxu0 0.0
    %266 = vmatprep.subr.mxu0 0.0
    %267 = vmatpush1.xpose.msra.mxu0 0.0
    %268 = vmatprep.subr.mxu0 0.0
    %269 = vmatpush1.xpose.msra.mxu0 0.0
    %270 = vmatprep.subr.mxu0 0.0
    %271 = vmatpush1.xpose.msra.mxu0 0.0
    %272 = vmatprep.subr.mxu0 0.0
    %273 = vmatpush1.xpose.msra.mxu0 0.0
    %274 = vmatprep.subr.mxu0 0.0
    %275 = vmatpush1.xpose.msra.mxu0 0.0
    %276 = vmatprep.subr.mxu0 0.0
    %277 = vmatpush1.xpose.msra.mxu0 0.0
    %278 = vmatprep.subr.mxu0 0.0
    %279 = vmatpush1.xpose.msra.mxu0 0.0
    %280 = vmatprep.subr.mxu0 0.0
    %281 = vmatpush1.xpose.msra.mxu0 0.0
    %282 = vmatprep.subr.mxu0 0.0
    %283 = vmatpush1.xpose.msra.mxu0 0.0
    %284 = vmatprep.subr.mxu0 0.0
    %285 = vmatpush1.xpose.msra.mxu0 0.0
    %286 = vmatprep.subr.mxu0 0.0
    %287 = vmatpush1.xpose.msra.mxu0 0.0
    %288 = vmatprep.subr.mxu0 0.0
    %289 = vmatpush1.xpose.msra.mxu0 0.0
    %290 = vmatprep.subr.mxu0 0.0
    %291 = vmatpush1.xpose.msra.mxu0 0.0
    %292 = vmatprep.subr.mxu0 0.0
    %293 = vmatpush1.xpose.msra.mxu0 0.0
    %294 = vmatprep.subr.mxu0 0.0
    %295 = vmatpush1.xpose.msra.mxu0 0.0
    %296 = vmatprep.subr.mxu0 0.0
    %297 = vmatpush1.xpose.msra.mxu0 0.0
    %298 = vmatprep.subr.mxu0 0.0
    %299 = vmatpush1.xpose.msra.mxu0 0.0
    %300 = vmatprep.subr.mxu0 0.0
    %301 = vmatpush1.xpose.msra.mxu0 0.0
    %302 = vmatprep.subr.mxu0 0.0
    %303 = vmatpush1.xpose.msra.mxu0 0.0
    %304 = vmatprep.subr.mxu0 0.0
    %305 = vmatpush1.xpose.msra.mxu0 0.0
    %306 = vmatprep.subr.mxu0 0.0
    %307 = vmatpush1.xpose.msra.mxu0 0.0
    %308 = vmatprep.subr.mxu0 0.0
    %309 = vmatpush1.xpose.msra.mxu0 0.0
    %310 = vmatprep.subr.mxu0 0.0
    %311 = vmatpush1.xpose.msra.mxu0 0.0
    %312 = vmatprep.subr.mxu0 0.0
    %313 = vmatpush1.xpose.msra.mxu0 0.0
    %314 = vmatprep.subr.mxu0 0.0
    %315 = vmatpush1.xpose.msra.mxu0 0.0
    %316 = vmatprep.subr.mxu0 0.0
    %317 = vmatpush1.xpose.msra.mxu0 0.0
    %318 = vmatprep.mubr.f32.mxu0 0.0
    %319 = vmatmul.mubr.f32.gmra.mrb[0].mxu0 %v250
    %v320 = vpop.f32.mrb[0].mxu0
    %v321 = vadd.f32 0.0, %v320
    %v322 = vpop.f32.mrb[0].mxu0
    %323 = vdwg.mxu0
    %v324 = vld [vmem:[#allocation5] sm:$0xff]
    %v325 = vld [vmem:[#allocation5 + $0x8] sm:$0xff]
    %vm326 = vcmp.eq.f32.partialorder %v324, 0.0
    %vm327 = vcmp.eq.f32.partialorder %v325, 0.0
    %v328 = vsel %vm326, -1e+09, %v244
    %v329 = vsel %vm327, -1e+09, %v321
    %vm330 = vcmask 64512
    %v331 = vsel %vm330, %v328, -inf
    %332 = vmax.xlane.f32.xlu0 %v331
    %v333 = vpop.xlane.xlu0 %332
    %v334 = vsel %vm330, %v329, -inf
    %335 = vmax.xlane.f32.xlu0 %v334
    %v336 = vpop.xlane.xlu0 %335
    %v337 = vsub.f32 %v328, %v333
    %v338 = vsub.f32 %v329, %v336
    %v339 = vmul.f32 %v337, 1.442695
    %v340 = vpow.pop %v339
    %v341 = vmul.f32 %v338, 1.442695
    %v342 = vpow.pop %v341
    %v343 = vsel %vm330, %v340, 0.0
    %344 = vadd.xlane.f32.xlu0 %v343
    %v345 = vpop.xlane.xlu0 %344
    %v346 = vsel %vm330, %v342, 0.0
    %347 = vadd.xlane.f32.xlu0 %v346
    %v348 = vpop.xlane.xlu0 %347
    %v349 = vrcp.pop %v345
    %v350 = vrcp.pop %v348
    %v351 = vmul.f32 %v340, %v349
    %v352 = vmul.f32 %v342, %v350
    %353 = vst.msk [vmem:[#allocation11] sm:$0xff] %vm330, %v351
    %354 = vst.msk [vmem:[#allocation11 + $0x8] sm:$0xff] %vm330, %v352
    %355 = vrot.lane.b32.xlu0 %v162, 64
    %v356 = vpop.permute.xlu0 %355
    %v359 = vsel %vm330, %v351, 0
    %361 = vmatprep.subr.mxu0 0.0
    %362 = vmatpush1.msra.mxu0 %v356
    %363 = vmatprep.subr.mxu0 0.0
    %364 = vmatpush1.msra.mxu0 0.0
    %365 = vmatprep.subr.mxu0 0.0
    %366 = vmatpush1.msra.mxu0 0.0
    %367 = vmatprep.subr.mxu0 0.0
    %368 = vmatpush1.msra.mxu0 0.0
    %369 = vmatprep.subr.mxu0 0.0
    %370 = vmatpush1.msra.mxu0 0.0
    %371 = vmatprep.subr.mxu0 0.0
    %372 = vmatpush1.msra.mxu0 0.0
    %373 = vmatprep.subr.mxu0 0.0
    %374 = vmatpush1.msra.mxu0 0.0
    %375 = vmatprep.subr.mxu0 0.0
    %376 = vmatpush1.msra.mxu0 0.0
    %377 = vmatprep.subr.mxu0 0.0
    %378 = vmatpush1.msra.mxu0 0.0
    %379 = vmatprep.subr.mxu0 0.0
    %380 = vmatpush1.msra.mxu0 0.0
    %381 = vmatprep.subr.mxu0 0.0
    %382 = vmatpush1.msra.mxu0 0.0
    %383 = vmatprep.subr.mxu0 0.0
    %384 = vmatpush1.msra.mxu0 0.0
    %385 = vmatprep.subr.mxu0 0.0
    %386 = vmatpush1.msra.mxu0 0.0
    %387 = vmatprep.subr.mxu0 0.0
    %388 = vmatpush1.msra.mxu0 0.0
    %389 = vmatprep.subr.mxu0 0.0
    %390 = vmatpush1.msra.mxu0 0.0
    %391 = vmatprep.subr.mxu0 0.0
    %392 = vmatpush1.msra.mxu0 0.0
    %393 = vmatprep.subr.mxu0 0.0
    %394 = vmatpush1.msra.mxu0 0.0
    %395 = vmatprep.subr.mxu0 0.0
    %396 = vmatpush1.msra.mxu0 0.0
    %397 = vmatprep.subr.mxu0 0.0
    %398 = vmatpush1.msra.mxu0 0.0
    %399 = vmatprep.subr.mxu0 0.0
    %400 = vmatpush1.msra.mxu0 0.0
    %401 = vmatprep.subr.mxu0 0.0
    %402 = vmatpush1.msra.mxu0 0.0
    %403 = vmatprep.subr.mxu0 0.0
    %404 = vmatpush1.msra.mxu0 0.0
    %405 = vmatprep.subr.mxu0 0.0
    %406 = vmatpush1.msra.mxu0 0.0
    %407 = vmatprep.subr.mxu0 0.0
    %408 = vmatpush1.msra.mxu0 0.0
    %409 = vmatprep.subr.mxu0 0.0
    %410 = vmatpush1.msra.mxu0 0.0
    %411 = vmatprep.subr.mxu0 0.0
    %412 = vmatpush1.msra.mxu0 0.0
    %413 = vmatprep.subr.mxu0 0.0
    %414 = vmatpush1.msra.mxu0 0.0
    %415 = vmatprep.subr.mxu0 0.0
    %416 = vmatpush1.msra.mxu0 0.0
    %417 = vmatprep.subr.mxu0 0.0
    %418 = vmatpush1.msra.mxu0 0.0
    %419 = vmatprep.subr.mxu0 0.0
    %420 = vmatpush1.msra.mxu0 0.0
    %421 = vmatprep.subr.mxu0 0.0
    %422 = vmatpush1.msra.mxu0 0.0
    %423 = vmatprep.subr.mxu0 0.0
    %424 = vmatpush1.msra.mxu0 0.0
    %425 = vmatprep.mubr.f32.mxu0 0.0
    %426 = vmatmul.mubr.f32.gmra.mrb[0].mxu0 %v359
    %v427 = vpop.f32.mrb[0].mxu0
    %v428 = vadd.f32 0.0, %v427
    %v429 = vpop.f32.mrb[0].mxu0
    %430 = vdwg.mxu0
    %431 = vrot.lane.b32.xlu0 %v167, 64
    %v432 = vpop.permute.xlu0 %431
    %v435 = vsel %vm330, %v352, 0
    %437 = vmatprep.subr.mxu0 0.0
    %438 = vmatpush1.msra.mxu0 %v432
    %439 = vmatprep.subr.mxu0 0.0
    %440 = vmatpush1.msra.mxu0 0.0
    %441 = vmatprep.subr.mxu0 0.0
    %442 = vmatpush1.msra.mxu0 0.0
    %443 = vmatprep.subr.mxu0 0.0
    %444 = vmatpush1.msra.mxu0 0.0
    %445 = vmatprep.subr.mxu0 0.0
    %446 = vmatpush1.msra.mxu0 0.0
    %447 = vmatprep.subr.mxu0 0.0
    %448 = vmatpush1.msra.mxu0 0.0
    %449 = vmatprep.subr.mxu0 0.0
    %450 = vmatpush1.msra.mxu0 0.0
    %451 = vmatprep.subr.mxu0 0.0
    %452 = vmatpush1.msra.mxu0 0.0
    %453 = vmatprep.subr.mxu0 0.0
    %454 = vmatpush1.msra.mxu0 0.0
    %455 = vmatprep.subr.mxu0 0.0
    %456 = vmatpush1.msra.mxu0 0.0
    %457 = vmatprep.subr.mxu0 0.0
    %458 = vmatpush1.msra.mxu0 0.0
    %459 = vmatprep.subr.mxu0 0.0
    %460 = vmatpush1.msra.mxu0 0.0
    %461 = vmatprep.subr.mxu0 0.0
    %462 = vmatpush1.msra.mxu0 0.0
    %463 = vmatprep.subr.mxu0 0.0
    %464 = vmatpush1.msra.mxu0 0.0
    %465 = vmatprep.subr.mxu0 0.0
    %466 = vmatpush1.msra.mxu0 0.0
    %467 = vmatprep.subr.mxu0 0.0
    %468 = vmatpush1.msra.mxu0 0.0
    %469 = vmatprep.subr.mxu0 0.0
    %470 = vmatpush1.msra.mxu0 0.0
    %471 = vmatprep.subr.mxu0 0.0
    %472 = vmatpush1.msra.mxu0 0.0
    %473 = vmatprep.subr.mxu0 0.0
    %474 = vmatpush1.msra.mxu0 0.0
    %475 = vmatprep.subr.mxu0 0.0
    %476 = vmatpush1.msra.mxu0 0.0
    %477 = vmatprep.subr.mxu0 0.0
    %478 = vmatpush1.msra.mxu0 0.0
    %479 = vmatprep.subr.mxu0 0.0
    %480 = vmatpush1.msra.mxu0 0.0
    %481 = vmatprep.subr.mxu0 0.0
    %482 = vmatpush1.msra.mxu0 0.0
    %483 = vmatprep.subr.mxu0 0.0
    %484 = vmatpush1.msra.mxu0 0.0
    %485 = vmatprep.subr.mxu0 0.0
    %486 = vmatpush1.msra.mxu0 0.0
    %487 = vmatprep.subr.mxu0 0.0
    %488 = vmatpush1.msra.mxu0 0.0
    %489 = vmatprep.subr.mxu0 0.0
    %490 = vmatpush1.msra.mxu0 0.0
    %491 = vmatprep.subr.mxu0 0.0
    %492 = vmatpush1.msra.mxu0 0.0
    %493 = vmatprep.subr.mxu0 0.0
    %494 = vmatpush1.msra.mxu0 0.0
    %495 = vmatprep.subr.mxu0 0.0
    %496 = vmatpush1.msra.mxu0 0.0
    %497 = vmatprep.subr.mxu0 0.0
    %498 = vmatpush1.msra.mxu0 0.0
    %499 = vmatprep.subr.mxu0 0.0
    %500 = vmatpush1.msra.mxu0 0.0
    %501 = vmatprep.mubr.f32.mxu0 0.0
    %502 = vmatmul.mubr.f32.gmra.mrb[0].mxu0 %v435
    %v503 = vpop.f32.mrb[0].mxu0
    %v504 = vadd.f32 0.0, %v503
    %v505 = vpop.f32.mrb[0].mxu0
    %506 = vdwg.mxu0
    %v507 = vld [vmem:[#allocation8] sm:$0xff]
    %v508 = vld [vmem:[#allocation8 + $0x8] sm:$0xff]
    %v509 = vld [vmem:[#allocation8 + $0x10] sm:$0xff]
    %v510 = vld [vmem:[#allocation8 + $0x18] sm:$0xff]
    %v512 = vsel %vm88, %v428, 0
    %v515 = vsel %vm88, %v504, 0
    %517 = vmatprep.subr.mxu0 0.0
    %518 = vmatpush1.msra.mxu0 %v507
    %519 = vmatprep.subr.mxu0 0.0
    %520 = vmatpush1.msra.mxu0 %v508
    %521 = vmatprep.subr.mxu0 0.0
    %522 = vmatpush1.msra.mxu0 %v509
    %523 = vmatprep.subr.mxu0 0.0
    %524 = vmatpush1.msra.mxu0 %v510
    %525 = vmatprep.subr.mxu0 0.0
    %526 = vmatpush1.msra.mxu0 0.0
    %527 = vmatprep.subr.mxu0 0.0
    %528 = vmatpush1.msra.mxu0 0.0
    %529 = vmatprep.subr.mxu0 0.0
    %530 = vmatpush1.msra.mxu0 0.0
    %531 = vmatprep.subr.mxu0 0.0
    %532 = vmatpush1.msra.mxu0 0.0
    %533 = vmatprep.subr.mxu0 0.0
    %534 = vmatpush1.msra.mxu0 0.0
    %535 = vmatprep.subr.mxu0 0.0
    %536 = vmatpush1.msra.mxu0 0.0
    %537 = vmatprep.subr.mxu0 0.0
    %538 = vmatpush1.msra.mxu0 0.0
    %539 = vmatprep.subr.mxu0 0.0
    %540 = vmatpush1.msra.mxu0 0.0
    %541 = vmatprep.subr.mxu0 0.0
    %542 = vmatpush1.msra.mxu0 0.0
    %543 = vmatprep.subr.mxu0 0.0
    %544 = vmatpush1.msra.mxu0 0.0
    %545 = vmatprep.subr.mxu0 0.0
    %546 = vmatpush1.msra.mxu0 0.0
    %547 = vmatprep.subr.mxu0 0.0
    %548 = vmatpush1.msra.mxu0 0.0
    %549 = vmatprep.subr.mxu0 0.0
    %550 = vmatpush1.msra.mxu0 0.0
    %551 = vmatprep.subr.mxu0 0.0
    %552 = vmatpush1.msra.mxu0 0.0
    %553 = vmatprep.subr.mxu0 0.0
    %554 = vmatpush1.msra.mxu0 0.0
    %555 = vmatprep.subr.mxu0 0.0
    %556 = vmatpush1.msra.mxu0 0.0
    %557 = vmatprep.subr.mxu0 0.0
    %558 = vmatpush1.msra.mxu0 0.0
    %559 = vmatprep.subr.mxu0 0.0
    %560 = vmatpush1.msra.mxu0 0.0
    %561 = vmatprep.subr.mxu0 0.0
    %562 = vmatpush1.msra.mxu0 0.0
    %563 = vmatprep.subr.mxu0 0.0
    %564 = vmatpush1.msra.mxu0 0.0
    %565 = vmatprep.subr.mxu0 0.0
    %566 = vmatpush1.msra.mxu0 0.0
    %567 = vmatprep.subr.mxu0 0.0
    %568 = vmatpush1.msra.mxu0 0.0
    %569 = vmatprep.subr.mxu0 0.0
    %570 = vmatpush1.msra.mxu0 0.0
    %571 = vmatprep.subr.mxu0 0.0
    %572 = vmatpush1.msra.mxu0 0.0
    %573 = vmatprep.subr.mxu0 0.0
    %574 = vmatpush1.msra.mxu0 0.0
    %575 = vmatprep.subr.mxu0 0.0
    %576 = vmatpush1.msra.mxu0 0.0
    %577 = vmatprep.subr.mxu0 0.0
    %578 = vmatpush1.msra.mxu0 0.0
    %579 = vmatprep.subr.mxu0 0.0
    %580 = vmatpush1.msra.mxu0 0.0
    %581 = vmatprep.mubr.f32.mxu0 0.0
    %582 = vmatmul.mubr.f32.gmra.mrb[0].mxu0 %v512
    %v583 = vpop.f32.mrb[0].mxu0
    %v584 = vadd.f32 0.0, %v583
    %v585 = vpop.f32.mrb[0].mxu0
    %586 = vmatprep.mubr.f32.mxu0 0.0
    %587 = vmatmul.mubr.f32.gmra.mrb[0].mxu0 %v515
    %v588 = vpop.f32.mrb[0].mxu0
    %v589 = vadd.f32 0.0, %v588
    %v590 = vpop.f32.mrb[0].mxu0
    %591 = vdwg.mxu0
    %v592 = vadd.f32 %v584, %v82
    %v593 = vadd.f32 %v589, %v83
    %v594 = vsel %vm88, %v592, 0.0
    %595 = vadd.xlane.f32.xlu0 %v594
    %v596 = vpop.xlane.xlu0 %595
    %v597 = vsel %vm88, %v593, 0.0
    %598 = vadd.xlane.f32.xlu0 %v597
    %v599 = vpop.xlane.xlu0 %598
    %v600 = vrcp.pop 32.0
    %v601 = vmul.f32 %v596, %v600
    %v602 = vmul.f32 %v599, %v600
    %v603 = vsub.f32 %v592, %v601
    %v604 = vsub.f32 %v593, %v602
    %v605 = vmul.f32 %v603, %v603
    %v606 = vmul.f32 %v604, %v604
    %v607 = vsel %vm88, %v605, 0.0
    %608 = vadd.xlane.f32.xlu0 %v607
    %v609 = vpop.xlane.xlu0 %608
    %v610 = vsel %vm88, %v606, 0.0
    %611 = vadd.xlane.f32.xlu0 %v610
    %v612 = vpop.xlane.xlu0 %611
    %v613 = vmul.f32 %v609, %v600
    %v614 = vmul.f32 %v612, %v600
    %v615 = vadd.f32 %v613, 1e-06
    %v616 = vadd.f32 %v614, 1e-06
    %v617 = vrsqrt.pop %v615
    %v618 = vrsqrt.pop %v616
    %v619 = vmul.f32 %v603, %v617
    %v620 = vmul.f32 %v604, %v618
    %v621 = vld [vmem:[%s4] sm:$0x1]
    %v623 = vlaneseq
    %v624 = vshrl.u32 %v623, 7
    %v625 = vsub.s32 0, %v624
    %v626 = vrot.slane %v621, %v625
    %v628 = vmul.f32 %v619, %v626
    %v629 = vmul.f32 %v620, %v626
    %v630 = vld [vmem:[%s5] sm:$0x1]
    %v632 = vlaneseq
    %v633 = vshrl.u32 %v632, 7
    %v634 = vsub.s32 0, %v633
    %v635 = vrot.slane %v630, %v634
    %v637 = vadd.f32 %v628, %v635
    %v638 = vadd.f32 %v629, %v635
    %639 = vst.msk [vmem:[#allocation10] sm:$0xff] %vm88, %v637
    %640 = vst.msk [vmem:[#allocation10 + $0x8] sm:$0xff] %vm88, %v638
    // Predicated region
    $region42: #{tpu_custom_call.1} parent=1 // pred_check
      _
    $region43: #{tpu_custom_call.1} parent=1 // pred_check_branch
      %642 = sbr.rel (0) target = $region45
    $region44: #{tpu_custom_call.1} parent=1 // pred_region
      %s644 = ssub.s32 256, 256
      %645 = vsyncadd [#allocation4], %s644
      %s646 = sshll.u32 [#allocation10], 4
      %s647 = int_to_ptr.vmem [resolvable:$true] %s646
      %652 = dma.vmem_to_hbm [thread:$0]  %s647, 256, %s6, [#allocation4], 128, 128, 8
    $region45: #{tpu_custom_call.1} parent=1 // pred_fallthru
      _
    // Predicated region
    $region46: #{tpu_custom_call.1} parent=1 // pred_check
      _
    $region47: #{tpu_custom_call.1} parent=1 // pred_check_branch
      %654 = sbr.rel (0) target = $region49
    $region48: #{tpu_custom_call.1} parent=1 // pred_region
      %s656 = ssub.s32 256, 256
      %657 = vsyncadd [#allocation12], %s656
      %s658 = sshll.u32 [#allocation11], 4
      %s659 = int_to_ptr.vmem [resolvable:$true] %s658
      %664 = dma.vmem_to_hbm [thread:$0]  %s659, 256, %s7, [#allocation12], 128, 128, 8
    $region49: #{tpu_custom_call.1} parent=1 // pred_fallthru
      _
    // Predicated region
    $region50: #{tpu_custom_call.1} parent=1 // pred_check
      _
    $region51: #{tpu_custom_call.1} parent=1 // pred_check_branch
      %666 = sbr.rel (0) target = $region53
    $region52: #{tpu_custom_call.1} parent=1 // pred_region
      %667 = dma.done [#allocation4], 256
    $region53: #{tpu_custom_call.1} parent=1 // pred_fallthru
      _
    // Predicated region
    $region54: #{tpu_custom_call.1} parent=1 // pred_check
      _
    $region55: #{tpu_custom_call.1} parent=1 // pred_check_branch
      %669 = sbr.rel (0) target = $region57
    $region56: #{tpu_custom_call.1} parent=1 // pred_region
      %670 = dma.done [#allocation12], 256
    $region57: #{tpu_custom_call.1} parent=1 // pred_fallthru
      _
    %671 = vsyncpa [#allocation3], 1
    %672 = vsyncpa [#allocation6], 1
    %673 = vsyncpa [#allocation9], 1
    %674 = vsyncpa [#allocation4], 1
    %675 = vsyncpa [#allocation12], 1

</llo_original>
